<compile_context>
chip_gen: v7x
topology: tpu7x:2x2x1
jax: 0.10.0
libtpu: 0.0.40
codegen_flags: <defaults>
</compile_context>

<pallas_src>
import functools

import jax
import jax.numpy as jnp
import numpy as np
from jax import lax
from jax.experimental import pallas as pl
from jax.experimental.pallas import tpu as pltpu

LEAKY_SLOPE = 0.01   # PyTorch nn.LeakyReLU() default
BN_EPS = 1e-5        # PyTorch nn.BatchNorm1d default


def _leaky_relu(h):
    return jnp.where(h > 0, h, LEAKY_SLOPE * h)


def _make_decoder_kernel(config):
    """Builds the fused per-instance decoder kernel.

    Ref order:
      x, pars, emb_tables..., w_in, w_hidden..., w_out, bn_packed, out
    All weights are pre-transposed to [in, out]; bn_packed rows are
    (gamma_0, beta_0, gamma_1, beta_1, ...) lane-padded to max feature width.
    """
    B = config["batch"]
    bn_features = config["bn_features"]        # (hidden[0], hidden[1], ...)
    n_emb = config["n_emb"]
    num_emb_padded = config["num_emb_padded"]
    n_trans = config["n_hidden_trans"]
    inv_b = 1.0 / B

    def kernel(*refs):
        x_ref = refs[0]
        pars_ref = refs[1]
        emb_refs = refs[2:2 + n_emb]
        w_in_ref = refs[2 + n_emb]
        w_h_refs = refs[3 + n_emb:3 + n_emb + n_trans]
        w_out_ref = refs[3 + n_emb + n_trans]
        bn_ref = refs[4 + n_emb + n_trans]
        o_ref = refs[5 + n_emb + n_trans]

        def batch_norm(h, k):
            # Training-mode BN: batch mean, biased variance, eps, affine.
            # One-pass stats + folded scale/shift (2 VPU passes over [B,F]).
            f = bn_features[k]
            gamma = bn_ref[2 * k:2 * k + 1, 0:f]
            beta = bn_ref[2 * k + 1:2 * k + 2, 0:f]
            mean = jnp.sum(h, axis=0, keepdims=True) * inv_b
            mean_sq = jnp.sum(h * h, axis=0, keepdims=True) * inv_b
            var = mean_sq - mean * mean
            scale = gamma * lax.rsqrt(var + BN_EPS)
            shift = beta - mean * scale
            return h * scale + shift

        x = x_ref[0]          # [B, latent]
        idx = pars_ref[0]     # [B, n_emb] int32

        # dense_in -> LeakyReLU -> batch_norm_in
        h = jnp.dot(x, w_in_ref[...], preferred_element_type=jnp.float32)
        h = _leaky_relu(h)
        h = batch_norm(h, 0)

        # Embedding lookups as one-hot @ table (MXU-friendly gather; the pad
        # rows of the table are never selected because indices < num_embeddings).
        embs = []
        for j in range(n_emb):
            ne = num_emb_padded[j]
            onehot = (
                lax.broadcasted_iota(jnp.int32, (B, ne), 1) == idx[:, j:j + 1]
            ).astype(jnp.float32)
            embs.append(
                jnp.dot(onehot, emb_refs[j][...],
                        preferred_element_type=jnp.float32))
        pe = embs[0] if n_emb == 1 else jnp.concatenate(embs, axis=1)

        # hidden layers: cat(h, pe) -> dense -> LeakyReLU -> BN
        for k in range(n_trans):
            h = jnp.concatenate([h, pe], axis=1)
            h = jnp.dot(h, w_h_refs[k][...], preferred_element_type=jnp.float32)
            h = _leaky_relu(h)
            h = batch_norm(h, k + 1)

        # final: cat(h, pe) -> dense_out  (state_dim = 128 -> lane-dense store)
        h = jnp.concatenate([h, pe], axis=1)
        o_ref[0] = jnp.dot(h, w_out_ref[...],
                           preferred_element_type=jnp.float32)

    return kernel


def init_decoder_params(key, latent_dim, state_dim, hidden_neurons, pars_dim):
    """Deterministic synthetic parameters (weights pre-transposed to [in, out])."""
    if len(pars_dim) == 1:
        pars_embedding_dim = [latent_dim]
    elif len(pars_dim) == 2:
        pars_embedding_dim = [latent_dim, latent_dim // 2]
    else:
        raise ValueError("pars_dim must have 1 or 2 entries (module contract)")
    total_emb = sum(pars_embedding_dim)

    n_hidden_trans = len(hidden_neurons) - 1
    n_keys = 2 + n_hidden_trans + len(pars_dim)
    keys = jax.random.split(key, n_keys)
    ki = iter(range(n_keys))

    params = {}

    # Embedding tables, rows zero-padded to a multiple of 128 for a clean
    # one-hot-matmul contraction dim.
    emb_tables = []
    for ne, ed in zip(pars_dim, pars_embedding_dim):
        tbl = jax.random.normal(keys[next(ki)], (ne, ed), jnp.float32)
        ne_pad = int(np.ceil(ne / 128.0) * 128)
        emb_tables.append(jnp.pad(tbl, ((0, ne_pad - ne), (0, 0))))
    params["emb_tables"] = emb_tables

    # dense_in : Linear(latent -> hidden[0], bias=False), stored as [in, out]
    params["w_in"] = (
        jax.random.normal(keys[next(ki)], (latent_dim, hidden_neurons[0]),
                          jnp.float32) / np.sqrt(latent_dim))

    # hidden dense layers : Linear(hidden[k] + total_emb -> hidden[k+1])
    w_h = []
    for k in range(n_hidden_trans):
        fan_in = hidden_neurons[k] + total_emb
        fan_out = hidden_neurons[k + 1]
        w_h.append(
            jax.random.normal(keys[next(ki)], (fan_in, fan_out), jnp.float32)
            / np.sqrt(fan_in))
    params["w_h"] = w_h

    # dense_out : Linear(hidden[-1] + total_emb -> state_dim)
    fan_in = hidden_neurons[-1] + total_emb
    params["w_out"] = (
        jax.random.normal(keys[next(ki)], (fan_in, state_dim), jnp.float32)
        / np.sqrt(fan_in))

    # BatchNorm affine params: batch_norm_in (hidden[0]) + batch_norm_layers
    # (hidden[1:]). Non-trivial deterministic values.
    gammas, betas = [], []
    for f in hidden_neurons:
        gammas.append(
            1.0 + 0.1 * jnp.arange(f, dtype=jnp.float32).reshape(1, f))
        betas.append(0.01 * jnp.arange(f, dtype=jnp.float32).reshape(1, f))
    params["gammas"] = gammas
    params["betas"] = betas

    # Pack gamma/beta into a single array (row 2k = gamma_k, row 2k+1 = beta_k),
    # lane-padded to max width -> one DMA descriptor instead of 2*len(hidden).
    max_f = max(hidden_neurons)
    rows = []
    for g, b in zip(gammas, betas):
        rows.append(jnp.pad(g, ((0, 0), (0, max_f - g.shape[1]))))
        rows.append(jnp.pad(b, ((0, 0), (0, max_f - b.shape[1]))))
    params["bn_packed"] = jnp.concatenate(rows, axis=0)
    return params


def _forward_instances(x, pars, params):
    """x: [N, B, latent] f32, pars: [N, B, n_emb] int32 -> [N, B, state_dim]."""
    N, B, latent_dim = x.shape
    w_in = params["w_in"]
    w_h = list(params["w_h"])
    w_out = params["w_out"]
    emb_tables = list(params["emb_tables"])
    bn_packed = params["bn_packed"]

    hidden = (int(w_in.shape[1]),) + tuple(int(w.shape[1]) for w in w_h)
    state_dim = int(w_out.shape[1])
    n_emb = len(emb_tables)
    total_emb = sum(int(t.shape[1]) for t in emb_tables)
    num_emb_padded = tuple(int(t.shape[0]) for t in emb_tables)

    config = dict(batch=B, bn_features=hidden, n_emb=n_emb,
                  num_emb_padded=num_emb_padded, n_hidden_trans=len(w_h))
    kernel = _make_decoder_kernel(config)

    inputs = [x, pars, *emb_tables, w_in, *w_h, w_out, bn_packed]

    def inst_spec(shape):
        # One instance per grid step.
        return pl.BlockSpec((1,) + tuple(shape[1:]),
                            lambda n, _r=len(shape) - 1: (n,) + (0,) * _r)

    def shared_spec(shape):
        # Grid-invariant block: stays resident across grid steps.
        return pl.BlockSpec(tuple(shape),
                            lambda n, _r=len(shape): (0,) * _r)

    in_specs = [inst_spec(x.shape), inst_spec(pars.shape)]
    in_specs += [shared_spec(a.shape) for a in inputs[2:]]
    out_spec = inst_spec((N, B, state_dim))

    # Advisory cost estimate so XLA schedules this micro-kernel tightly.
    mm_flops = 2 * B * (
        latent_dim * hidden[0]
        + sum((hidden[k] + total_emb) * hidden[k + 1] for k in range(len(w_h)))
        + (hidden[-1] + total_emb) * state_dim
        + sum(num_emb_padded[j] * int(emb_tables[j].shape[1])
              for j in range(n_emb)))
    bn_flops = 6 * B * sum(hidden)
    param_bytes = sum(int(np.prod(a.shape)) * 4 for a in inputs[2:])
    act_bytes = 4 * (int(np.prod(x.shape)) + int(np.prod(pars.shape))
                     + N * B * state_dim)
    cost = pl.CostEstimate(
        flops=int(N * (mm_flops + bn_flops)),
        transcendentals=int(N * sum(hidden)),      # one rsqrt per BN feature
        bytes_accessed=int(param_bytes + act_bytes))

    return pl.pallas_call(
        kernel,
        out_shape=jax.ShapeDtypeStruct((N, B, state_dim), jnp.float32),
        grid=(N,),
        in_specs=in_specs,
        out_specs=out_spec,
        compiler_params=pltpu.CompilerParams(
            dimension_semantics=("parallel",)),   # both v7x TensorCores
        cost_estimate=cost,
    )(*inputs)


@jax.jit
def supervised_decoder_forward(x, pars, params):
    """Accepts a single instance ([B, latent], [B, n_emb]) or a stack of
    independent instances ([N, B, latent], [N, B, n_emb]); BN stats are
    computed per instance."""
    if x.ndim == 2:
        return _forward_instances(x[None], pars[None], params)[0]
    return _forward_instances(x, pars, params)


def supervised_decoder_forward_ref(x, pars, params):
    """Pure-JAX reference (standard two-pass BN formulation) for validation."""
    w_in, w_h, w_out = params["w_in"], params["w_h"], params["w_out"]
    emb_tables = params["emb_tables"]
    gammas, betas = params["gammas"], params["betas"]

    def bn(h, g, b):
        mean = jnp.mean(h, axis=0, keepdims=True)
        var = jnp.mean((h - mean) ** 2, axis=0, keepdims=True)
        return (h - mean) / jnp.sqrt(var + BN_EPS) * g + b

    def one(xi, pi):
        h = _leaky_relu(xi @ w_in)
        h = bn(h, gammas[0], betas[0])
        embs = [emb_tables[j][pi[:, j]] for j in range(len(emb_tables))]
        pe = jnp.concatenate(embs, axis=1)
        for k, w in enumerate(w_h):
            h = jnp.concatenate([h, pe], axis=1)
            h = _leaky_relu(h @ w)
            h = bn(h, gammas[k + 1], betas[k + 1])
        h = jnp.concatenate([h, pe], axis=1)
        return h @ w_out

    if x.ndim == 2:
        return one(x, pars)
    return jax.vmap(one)(x, pars)


if __name__ == "__main__":
    # Module defaults, small batch; several independent instances exercise the
    # leading grid axis (the main launch-overhead amortization lever).
    latent_dim = 32
    state_dim = 128
    hidden_neurons = [16, 32, 64]
    pars_dim = (119,)
    num_instances = 4
    batch = 8

    key = jax.random.PRNGKey(0)
    k_x, k_pars, k_p = jax.random.split(key, 3)
    x = jax.random.normal(k_x, (num_instances, batch, latent_dim), jnp.float32)

    pars_cols = []
    for j, nd in enumerate(pars_dim):
        k_pars, sub = jax.random.split(k_pars)
        pars_cols.append(
            jax.random.randint(sub, (num_instances, batch, 1), 0, nd, jnp.int32))
    pars = jnp.concatenate(pars_cols, axis=-1)

    params = init_decoder_params(k_p, latent_dim, state_dim, hidden_neurons,
                                 pars_dim)

    out = supervised_decoder_forward(x, pars, params)
    out = jax.block_until_ready(out)

    ref = supervised_decoder_forward_ref(x, pars, params)
    assert out.shape == (num_instances, batch, state_dim)
    assert np.allclose(np.asarray(out), np.asarray(ref), atol=1e-3, rtol=1e-3)

    print("KERNEL_OK")
</pallas_src>

<mosaic_0001>
module attributes {stable_mosaic.version = 11 : i64} {
  func.func @kernel(%arg0: i32, %arg1: memref<1x8x32xf32, #tpu.memory_space<vmem>>, %arg2: memref<1x8x1xi32, #tpu.memory_space<vmem>>, %arg3: memref<128x32xf32, #tpu.memory_space<vmem>>, %arg4: memref<32x16xf32, #tpu.memory_space<vmem>>, %arg5: memref<48x32xf32, #tpu.memory_space<vmem>>, %arg6: memref<64x64xf32, #tpu.memory_space<vmem>>, %arg7: memref<96x128xf32, #tpu.memory_space<vmem>>, %arg8: memref<6x64xf32, #tpu.memory_space<vmem>>, %arg9: memref<1x8x128xf32, #tpu.memory_space<vmem>>) attributes {dimension_semantics = [#tpu.dimension_semantics<parallel>], iteration_bounds = array<i64: 4>, scalar_prefetch = 0 : i64, scratch_operands = 0 : i64, tpu.core_type = #tpu.core_type<tc>, window_params = [{transform_indices = @transform_0, window_bounds = array<i64: 1, 8, 32>}, {transform_indices = @transform_1, window_bounds = array<i64: 1, 8, 1>}, {pipeline_mode = #tpu.pipeline_mode<synchronous>, transform_indices = @transform_2, window_bounds = array<i64: 128, 32>}, {pipeline_mode = #tpu.pipeline_mode<synchronous>, transform_indices = @transform_3, window_bounds = array<i64: 32, 16>}, {pipeline_mode = #tpu.pipeline_mode<synchronous>, transform_indices = @transform_4, window_bounds = array<i64: 48, 32>}, {pipeline_mode = #tpu.pipeline_mode<synchronous>, transform_indices = @transform_5, window_bounds = array<i64: 64, 64>}, {pipeline_mode = #tpu.pipeline_mode<synchronous>, transform_indices = @transform_6, window_bounds = array<i64: 96, 128>}, {pipeline_mode = #tpu.pipeline_mode<synchronous>, transform_indices = @transform_7, window_bounds = array<i64: 6, 64>}, {transform_indices = @transform_8, window_bounds = array<i64: 1, 8, 128>}]} {
    %c0 = arith.constant 0 : index
    %c0_0 = arith.constant 0 : index
    %c0_1 = arith.constant 0 : index
    %0 = vector.load %arg1[%c0, %c0_0, %c0_1] : memref<1x8x32xf32, #tpu.memory_space<vmem>>, vector<1x8x32xf32>
    %1 = vector.shape_cast %0 : vector<1x8x32xf32> to vector<8x32xf32>
    %c0_2 = arith.constant 0 : index
    %c0_3 = arith.constant 0 : index
    %c0_4 = arith.constant 0 : index
    %2 = vector.load %arg2[%c0_2, %c0_3, %c0_4] : memref<1x8x1xi32, #tpu.memory_space<vmem>>, vector<1x8x1xi32>
    %3 = vector.shape_cast %2 : vector<1x8x1xi32> to vector<8x1xi32>
    %c0_5 = arith.constant 0 : index
    %c0_6 = arith.constant 0 : index
    %4 = vector.load %arg4[%c0_5, %c0_6] : memref<32x16xf32, #tpu.memory_space<vmem>>, vector<32x16xf32>
    %cst = arith.constant dense<0.000000e+00> : vector<8x16xf32>
    %5 = tpu.matmul %1, %4, %cst {dimension_numbers = #tpu.dot_dimension_numbers<[1], [0], [0], [1], [0, 0, 1, 1], [], []>} : vector<8x32xf32>, vector<32x16xf32>, vector<8x16xf32> -> vector<8x16xf32>
    %cst_7 = arith.constant 0.000000e+00 : f32
    %6 = vector.broadcast %cst_7 : f32 to vector<8x16xf32>
    %7 = arith.cmpf ogt, %5, %6 : vector<8x16xf32>
    %cst_8 = arith.constant 0.00999999977 : f32
    %8 = vector.broadcast %cst_8 : f32 to vector<8x16xf32>
    %9 = arith.mulf %8, %5 : vector<8x16xf32>
    %10 = arith.select %7, %5, %9 : vector<8x16xi1>, vector<8x16xf32>
    %c0_9 = arith.constant 0 : index
    %c0_10 = arith.constant 0 : index
    %11 = vector.load %arg8[%c0_9, %c0_10] : memref<6x64xf32, #tpu.memory_space<vmem>>, vector<1x16xf32>
    %c1 = arith.constant 1 : index
    %c0_11 = arith.constant 0 : index
    %12 = vector.load %arg8[%c1, %c0_11] : memref<6x64xf32, #tpu.memory_space<vmem>>, vector<1x16xf32>
    %cst_12 = arith.constant dense<0.000000e+00> : vector<16xf32>
    %13 = vector.multi_reduction <add>, %10, %cst_12 [0] : vector<8x16xf32> to vector<16xf32>
    %14 = vector.shape_cast %13 : vector<16xf32> to vector<1x16xf32>
    %cst_13 = arith.constant 1.250000e-01 : f32
    %15 = vector.broadcast %cst_13 : f32 to vector<1x16xf32>
    %16 = arith.mulf %14, %15 : vector<1x16xf32>
    %17 = arith.mulf %10, %10 : vector<8x16xf32>
    %cst_14 = arith.constant dense<0.000000e+00> : vector<16xf32>
    %18 = vector.multi_reduction <add>, %17, %cst_14 [0] : vector<8x16xf32> to vector<16xf32>
    %19 = vector.shape_cast %18 : vector<16xf32> to vector<1x16xf32>
    %cst_15 = arith.constant 1.250000e-01 : f32
    %20 = vector.broadcast %cst_15 : f32 to vector<1x16xf32>
    %21 = arith.mulf %19, %20 : vector<1x16xf32>
    %22 = arith.mulf %16, %16 : vector<1x16xf32>
    %23 = arith.subf %21, %22 : vector<1x16xf32>
    %cst_16 = arith.constant 9.99999974E-6 : f32
    %24 = vector.broadcast %cst_16 : f32 to vector<1x16xf32>
    %25 = arith.addf %23, %24 : vector<1x16xf32>
    %26 = math.rsqrt %25 : vector<1x16xf32>
    %27 = arith.mulf %11, %26 : vector<1x16xf32>
    %28 = arith.mulf %16, %27 : vector<1x16xf32>
    %29 = arith.subf %12, %28 : vector<1x16xf32>
    %30 = vector.broadcast %27 : vector<1x16xf32> to vector<8x16xf32>
    %31 = arith.mulf %10, %30 : vector<8x16xf32>
    %32 = vector.broadcast %29 : vector<1x16xf32> to vector<8x16xf32>
    %33 = arith.addf %31, %32 : vector<8x16xf32>
    %34 = tpu.iota {dimensions = array<i32: 1>} : vector<8x128xi32>
    %35 = vector.broadcast %3 : vector<8x1xi32> to vector<8x128xi32>
    %36 = arith.cmpi eq, %34, %35 : vector<8x128xi32>
    %37 = arith.extui %36 : vector<8x128xi1> to vector<8x128xi32>
    %38 = arith.sitofp %37 : vector<8x128xi32> to vector<8x128xf32>
    %c0_17 = arith.constant 0 : index
    %c0_18 = arith.constant 0 : index
    %39 = vector.load %arg3[%c0_17, %c0_18] : memref<128x32xf32, #tpu.memory_space<vmem>>, vector<128x32xf32>
    %cst_19 = arith.constant dense<0.000000e+00> : vector<8x32xf32>
    %40 = tpu.matmul %38, %39, %cst_19 {dimension_numbers = #tpu.dot_dimension_numbers<[1], [0], [0], [1], [0, 0, 1, 1], [], []>} : vector<8x128xf32>, vector<128x32xf32>, vector<8x32xf32> -> vector<8x32xf32>
    %41 = tpu.concatenate %33, %40 in 1 : vector<8x16xf32>, vector<8x32xf32> -> vector<8x48xf32>
    %c0_20 = arith.constant 0 : index
    %c0_21 = arith.constant 0 : index
    %42 = vector.load %arg5[%c0_20, %c0_21] : memref<48x32xf32, #tpu.memory_space<vmem>>, vector<48x32xf32>
    %cst_22 = arith.constant dense<0.000000e+00> : vector<8x32xf32>
    %43 = tpu.matmul %41, %42, %cst_22 {dimension_numbers = #tpu.dot_dimension_numbers<[1], [0], [0], [1], [0, 0, 1, 1], [], []>} : vector<8x48xf32>, vector<48x32xf32>, vector<8x32xf32> -> vector<8x32xf32>
    %cst_23 = arith.constant 0.000000e+00 : f32
    %44 = vector.broadcast %cst_23 : f32 to vector<8x32xf32>
    %45 = arith.cmpf ogt, %43, %44 : vector<8x32xf32>
    %cst_24 = arith.constant 0.00999999977 : f32
    %46 = vector.broadcast %cst_24 : f32 to vector<8x32xf32>
    %47 = arith.mulf %46, %43 : vector<8x32xf32>
    %48 = arith.select %45, %43, %47 : vector<8x32xi1>, vector<8x32xf32>
    %c2 = arith.constant 2 : index
    %c0_25 = arith.constant 0 : index
    %49 = vector.load %arg8[%c2, %c0_25] : memref<6x64xf32, #tpu.memory_space<vmem>>, vector<1x32xf32>
    %c3 = arith.constant 3 : index
    %c0_26 = arith.constant 0 : index
    %50 = vector.load %arg8[%c3, %c0_26] : memref<6x64xf32, #tpu.memory_space<vmem>>, vector<1x32xf32>
    %cst_27 = arith.constant dense<0.000000e+00> : vector<32xf32>
    %51 = vector.multi_reduction <add>, %48, %cst_27 [0] : vector<8x32xf32> to vector<32xf32>
    %52 = vector.shape_cast %51 : vector<32xf32> to vector<1x32xf32>
    %cst_28 = arith.constant 1.250000e-01 : f32
    %53 = vector.broadcast %cst_28 : f32 to vector<1x32xf32>
    %54 = arith.mulf %52, %53 : vector<1x32xf32>
    %55 = arith.mulf %48, %48 : vector<8x32xf32>
    %cst_29 = arith.constant dense<0.000000e+00> : vector<32xf32>
    %56 = vector.multi_reduction <add>, %55, %cst_29 [0] : vector<8x32xf32> to vector<32xf32>
    %57 = vector.shape_cast %56 : vector<32xf32> to vector<1x32xf32>
    %cst_30 = arith.constant 1.250000e-01 : f32
    %58 = vector.broadcast %cst_30 : f32 to vector<1x32xf32>
    %59 = arith.mulf %57, %58 : vector<1x32xf32>
    %60 = arith.mulf %54, %54 : vector<1x32xf32>
    %61 = arith.subf %59, %60 : vector<1x32xf32>
    %cst_31 = arith.constant 9.99999974E-6 : f32
    %62 = vector.broadcast %cst_31 : f32 to vector<1x32xf32>
    %63 = arith.addf %61, %62 : vector<1x32xf32>
    %64 = math.rsqrt %63 : vector<1x32xf32>
    %65 = arith.mulf %49, %64 : vector<1x32xf32>
    %66 = arith.mulf %54, %65 : vector<1x32xf32>
    %67 = arith.subf %50, %66 : vector<1x32xf32>
    %68 = vector.broadcast %65 : vector<1x32xf32> to vector<8x32xf32>
    %69 = arith.mulf %48, %68 : vector<8x32xf32>
    %70 = vector.broadcast %67 : vector<1x32xf32> to vector<8x32xf32>
    %71 = arith.addf %69, %70 : vector<8x32xf32>
    %72 = tpu.concatenate %71, %40 in 1 : vector<8x32xf32>, vector<8x32xf32> -> vector<8x64xf32>
    %c0_32 = arith.constant 0 : index
    %c0_33 = arith.constant 0 : index
    %73 = vector.load %arg6[%c0_32, %c0_33] : memref<64x64xf32, #tpu.memory_space<vmem>>, vector<64x64xf32>
    %cst_34 = arith.constant dense<0.000000e+00> : vector<8x64xf32>
    %74 = tpu.matmul %72, %73, %cst_34 {dimension_numbers = #tpu.dot_dimension_numbers<[1], [0], [0], [1], [0, 0, 1, 1], [], []>} : vector<8x64xf32>, vector<64x64xf32>, vector<8x64xf32> -> vector<8x64xf32>
    %cst_35 = arith.constant 0.000000e+00 : f32
    %75 = vector.broadcast %cst_35 : f32 to vector<8x64xf32>
    %76 = arith.cmpf ogt, %74, %75 : vector<8x64xf32>
    %cst_36 = arith.constant 0.00999999977 : f32
    %77 = vector.broadcast %cst_36 : f32 to vector<8x64xf32>
    %78 = arith.mulf %77, %74 : vector<8x64xf32>
    %79 = arith.select %76, %74, %78 : vector<8x64xi1>, vector<8x64xf32>
    %c4 = arith.constant 4 : index
    %c0_37 = arith.constant 0 : index
    %80 = vector.load %arg8[%c4, %c0_37] : memref<6x64xf32, #tpu.memory_space<vmem>>, vector<1x64xf32>
    %c5 = arith.constant 5 : index
    %c0_38 = arith.constant 0 : index
    %81 = vector.load %arg8[%c5, %c0_38] : memref<6x64xf32, #tpu.memory_space<vmem>>, vector<1x64xf32>
    %cst_39 = arith.constant dense<0.000000e+00> : vector<64xf32>
    %82 = vector.multi_reduction <add>, %79, %cst_39 [0] : vector<8x64xf32> to vector<64xf32>
    %83 = vector.shape_cast %82 : vector<64xf32> to vector<1x64xf32>
    %cst_40 = arith.constant 1.250000e-01 : f32
    %84 = vector.broadcast %cst_40 : f32 to vector<1x64xf32>
    %85 = arith.mulf %83, %84 : vector<1x64xf32>
    %86 = arith.mulf %79, %79 : vector<8x64xf32>
    %cst_41 = arith.constant dense<0.000000e+00> : vector<64xf32>
    %87 = vector.multi_reduction <add>, %86, %cst_41 [0] : vector<8x64xf32> to vector<64xf32>
    %88 = vector.shape_cast %87 : vector<64xf32> to vector<1x64xf32>
    %cst_42 = arith.constant 1.250000e-01 : f32
    %89 = vector.broadcast %cst_42 : f32 to vector<1x64xf32>
    %90 = arith.mulf %88, %89 : vector<1x64xf32>
    %91 = arith.mulf %85, %85 : vector<1x64xf32>
    %92 = arith.subf %90, %91 : vector<1x64xf32>
    %cst_43 = arith.constant 9.99999974E-6 : f32
    %93 = vector.broadcast %cst_43 : f32 to vector<1x64xf32>
    %94 = arith.addf %92, %93 : vector<1x64xf32>
    %95 = math.rsqrt %94 : vector<1x64xf32>
    %96 = arith.mulf %80, %95 : vector<1x64xf32>
    %97 = arith.mulf %85, %96 : vector<1x64xf32>
    %98 = arith.subf %81, %97 : vector<1x64xf32>
    %99 = vector.broadcast %96 : vector<1x64xf32> to vector<8x64xf32>
    %100 = arith.mulf %79, %99 : vector<8x64xf32>
    %101 = vector.broadcast %98 : vector<1x64xf32> to vector<8x64xf32>
    %102 = arith.addf %100, %101 : vector<8x64xf32>
    %103 = tpu.concatenate %102, %40 in 1 : vector<8x64xf32>, vector<8x32xf32> -> vector<8x96xf32>
    %c0_44 = arith.constant 0 : index
    %c0_45 = arith.constant 0 : index
    %104 = vector.load %arg7[%c0_44, %c0_45] : memref<96x128xf32, #tpu.memory_space<vmem>>, vector<96x128xf32>
    %cst_46 = arith.constant dense<0.000000e+00> : vector<8x128xf32>
    %105 = tpu.matmul %103, %104, %cst_46 {dimension_numbers = #tpu.dot_dimension_numbers<[1], [0], [0], [1], [0, 0, 1, 1], [], []>} : vector<8x96xf32>, vector<96x128xf32>, vector<8x128xf32> -> vector<8x128xf32>
    %c0_47 = arith.constant 0 : index
    %c0_48 = arith.constant 0 : index
    %c0_49 = arith.constant 0 : index
    %106 = vector.load %arg9[%c0_47, %c0_48, %c0_49] : memref<1x8x128xf32, #tpu.memory_space<vmem>>, vector<1x8x128xf32>
    %107 = vector.shape_cast %106 : vector<1x8x128xf32> to vector<8x128xf32>
    %108 = vector.shape_cast %105 : vector<8x128xf32> to vector<1x8x128xf32>
    tpu.vector_store %arg9[%c0_47, %c0_48, %c0_49], %108 {strides = array<i32>} : memref<1x8x128xf32, #tpu.memory_space<vmem>>, vector<1x8x128xf32>,
    return
  }
  func.func @transform_0(%arg0: i32) -> (i32, i32, i32) {
    %c0_i32 = arith.constant 0 : i32
    %c0_i32_0 = arith.constant 0 : i32
    %c0_i32_1 = arith.constant 0 : i32
    return %arg0, %c0_i32, %c0_i32_0 : i32, i32, i32
  }
  func.func @transform_1(%arg0: i32) -> (i32, i32, i32) {
    %c0_i32 = arith.constant 0 : i32
    %c0_i32_0 = arith.constant 0 : i32
    %c0_i32_1 = arith.constant 0 : i32
    return %arg0, %c0_i32, %c0_i32_0 : i32, i32, i32
  }
  func.func @transform_2(%arg0: i32) -> (i32, i32) {
    %c0_i32 = arith.constant 0 : i32
    %c0_i32_0 = arith.constant 0 : i32
    %c0_i32_1 = arith.constant 0 : i32
    return %c0_i32, %c0_i32_0 : i32, i32
  }
  func.func @transform_3(%arg0: i32) -> (i32, i32) {
    %c0_i32 = arith.constant 0 : i32
    %c0_i32_0 = arith.constant 0 : i32
    %c0_i32_1 = arith.constant 0 : i32
    return %c0_i32, %c0_i32_0 : i32, i32
  }
  func.func @transform_4(%arg0: i32) -> (i32, i32) {
    %c0_i32 = arith.constant 0 : i32
    %c0_i32_0 = arith.constant 0 : i32
    %c0_i32_1 = arith.constant 0 : i32
    return %c0_i32, %c0_i32_0 : i32, i32
  }
  func.func @transform_5(%arg0: i32) -> (i32, i32) {
    %c0_i32 = arith.constant 0 : i32
    %c0_i32_0 = arith.constant 0 : i32
    %c0_i32_1 = arith.constant 0 : i32
    return %c0_i32, %c0_i32_0 : i32, i32
  }
  func.func @transform_6(%arg0: i32) -> (i32, i32) {
    %c0_i32 = arith.constant 0 : i32
    %c0_i32_0 = arith.constant 0 : i32
    %c0_i32_1 = arith.constant 0 : i32
    return %c0_i32, %c0_i32_0 : i32, i32
  }
  func.func @transform_7(%arg0: i32) -> (i32, i32) {
    %c0_i32 = arith.constant 0 : i32
    %c0_i32_0 = arith.constant 0 : i32
    %c0_i32_1 = arith.constant 0 : i32
    return %c0_i32, %c0_i32_0 : i32, i32
  }
  func.func @transform_8(%arg0: i32) -> (i32, i32, i32) {
    %c0_i32 = arith.constant 0 : i32
    %c0_i32_0 = arith.constant 0 : i32
    %c0_i32_1 = arith.constant 0 : i32
    return %arg0, %c0_i32, %c0_i32_0 : i32, i32, i32
  }
}

</mosaic_0001>

<llo_original>
// kernel: supervised_decoder_forward.1
$region0: #{supervised_decoder_forward.1}
  #allocation0 [shape = 'u32[]', space=smem, size = 0x4, offset = 0x4, fixed_abs, tag = 'smem constant byte address 0x4 - core index']
  #allocation1 [shape = 'u32[144,128]{1,0:T(1,128)}', space=vmem, size = 0x12000, scoped, tag = 'internal scratch']
  %s0 = inlined_call_operand.vmem [shape: f32[4,8,32], index: 0, kind: input, shape index: {}]
  %s1 = inlined_call_operand.vmem [shape: s32[4,8,1], index: 1, kind: input, shape index: {}]
  %s2 = inlined_call_operand.vmem [shape: f32[128,32], index: 2, kind: input, shape index: {}]
  %s3 = inlined_call_operand.vmem [shape: f32[32,16], index: 3, kind: input, shape index: {}]
  %s4 = inlined_call_operand.vmem [shape: f32[48,32], index: 4, kind: input, shape index: {}]
  %s5 = inlined_call_operand.vmem [shape: f32[64,64], index: 5, kind: input, shape index: {}]
  %s6 = inlined_call_operand.vmem [shape: f32[96,128], index: 6, kind: input, shape index: {}]
  %s7 = inlined_call_operand.vmem [shape: f32[6,64], index: 7, kind: input, shape index: {}]
  %s8 = inlined_call_operand.hbm [shape: f32[4,8,128], index: 8, kind: output, shape index: {}]
  %s9 = sld [smem:[#allocation0]]
  $region65: #{supervised_decoder_forward.1} parent=0
    _
  %s11 = ssub.s32 1, %s9
  %s12 = scalar_select 0, %s11, %s9
  $region1: #{supervised_decoder_forward.1} parent=0
    #allocation2 [shape = 'u8[8192]{0}', space=vmem, size = 0x2000, scoped, tag = 'output window, operand 0']
    #allocation3 [shape = 's32[2]{0}', space=sflag, size = 0x8, scoped, tag = 'scoped memory for supervised_decoder_forward.1']
    %13 = vsyncpa [#allocation3], 0
    %s14 = scalar_lea.sflag [#allocation3], 1
    %15 = vsyncpa %s14, 0
    loop: start=0, step=1, limit=6
    $region2: #{supervised_decoder_forward.1} parent=1 // loop_pre_header
      _
    $region3: #{supervised_decoder_forward.1} parent=1 // loop_header
      %s17 = sphi 0, %s21
      %p18 = scmp.ge.s32.totalorder %s17, 6
      %s27 = sphi 0, %s29
      %s30 = sphi 0, %s27
      %s31 = sphi 0, %s30
      %s47 = sphi 0, %s31
      %s53 = sphi 0, %s55
      %s56 = sphi 0, %s53
      %s57 = sphi 0, %s56
      %s73 = sphi 0, %s57
      %s77 = sphi 0, %s77
      %s79 = sphi 0, %s77
      %s80 = sphi 0, %s79
      %s94 = sphi 0, %s80
      %s98 = sphi 0, %s98
      %s100 = sphi 0, %s98
      %s101 = sphi 0, %s100
      %s115 = sphi 0, %s101
      %s119 = sphi 0, %s119
      %s121 = sphi 0, %s119
      %s122 = sphi 0, %s121
      %s136 = sphi 0, %s122
      %s140 = sphi 0, %s140
      %s142 = sphi 0, %s140
      %s143 = sphi 0, %s142
      %s157 = sphi 0, %s143
      %s161 = sphi 0, %s161
      %s163 = sphi 0, %s161
      %s164 = sphi 0, %s163
      %s178 = sphi 0, %s164
      %s182 = sphi 0, %s182
      %s184 = sphi 0, %s182
      %s185 = sphi 0, %s184
      %s199 = sphi 0, %s185
      %s205 = sphi 0, %s207
      %s208 = sphi 0, %s205
      %s209 = sphi 0, %s208
      %s225 = sphi 0, %s209
    $region4: #{supervised_decoder_forward.1} parent=1 // loop_header_branch
      %20 = sbr.rel (%p18) target = $region8
    $region5: #{supervised_decoder_forward.1} parent=1 // loop_body
      %s22 = ssub.s32 %s17, 1
      %s23 = ssub.s32 %s17, 2
      %s24 = sadd.s32 %s17, 1
      %s25 = ssub.s32 %s17, %s24
      %p26 = scmp.eq.s32.totalorder %s25, 0
      %s28 = sadd.s32 %s27, 1
      %s29 = scalar_select %p26, %s27, %s28
      %p32 = pneg %p26
      %p33 = scmp.eq.s32.totalorder %s17, 3
      %p34 = por %p32, %p33
      %p35 = scmp.ne.s32.totalorder %s27, %s30
      %p36 = scmp.eq.s32.totalorder %s17, 0
      %p37 = por %p35, %p36
      %p38 = scmp.ne.s32.totalorder %s27, %s30
      %p39 = scmp.eq.s32.totalorder %s22, 3
      %p40 = por %p38, %p39
      %p41 = scmp.ne.s32.totalorder %s30, %s31
      %p42 = scmp.eq.s32.totalorder %s22, 0
      %p43 = por %p41, %p42
      %p44 = scmp.ne.s32.totalorder %s30, %s31
      %p45 = scmp.eq.s32.totalorder %s23, 3
      %p46 = por %p44, %p45
      %p48 = scmp.ne.s32.totalorder %s31, %s47
      %p49 = scmp.eq.s32.totalorder %s23, 0
      %p50 = por %p48, %p49
      %s51 = ssub.s32 %s17, %s24
      %p52 = scmp.eq.s32.totalorder %s51, 0
      %s54 = sadd.s32 %s53, 1
      %s55 = scalar_select %p52, %s53, %s54
      %p58 = pneg %p52
      %p59 = scmp.eq.s32.totalorder %s17, 3
      %p60 = por %p58, %p59
      %p61 = scmp.ne.s32.totalorder %s53, %s56
      %p62 = scmp.eq.s32.totalorder %s17, 0
      %p63 = por %p61, %p62
      %p64 = scmp.ne.s32.totalorder %s53, %s56
      %p65 = scmp.eq.s32.totalorder %s22, 3
      %p66 = por %p64, %p65
      %p67 = scmp.ne.s32.totalorder %s56, %s57
      %p68 = scmp.eq.s32.totalorder %s22, 0
      %p69 = por %p67, %p68
      %p70 = scmp.ne.s32.totalorder %s56, %s57
      %p71 = scmp.eq.s32.totalorder %s23, 3
      %p72 = por %p70, %p71
      %p74 = scmp.ne.s32.totalorder %s57, %s73
      %p75 = scmp.eq.s32.totalorder %s23, 0
      %p76 = por %p74, %p75
      %s78 = sadd.s32 %s77, 1
      %p81 = scmp.eq.s32.totalorder %s17, 3
      %p82 = scmp.ne.s32.totalorder %s77, %s79
      %p83 = scmp.eq.s32.totalorder %s17, 0
      %p84 = por %p82, %p83
      %p85 = scmp.ne.s32.totalorder %s77, %s79
      %p86 = scmp.eq.s32.totalorder %s22, 3
      %p87 = por %p85, %p86
      %p88 = scmp.ne.s32.totalorder %s79, %s80
      %p89 = scmp.eq.s32.totalorder %s22, 0
      %p90 = por %p88, %p89
      %p91 = scmp.ne.s32.totalorder %s79, %s80
      %p92 = scmp.eq.s32.totalorder %s23, 3
      %p93 = por %p91, %p92
      %p95 = scmp.ne.s32.totalorder %s80, %s94
      %p96 = scmp.eq.s32.totalorder %s23, 0
      %p97 = por %p95, %p96
      %s99 = sadd.s32 %s98, 1
      %p102 = scmp.eq.s32.totalorder %s17, 3
      %p103 = scmp.ne.s32.totalorder %s98, %s100
      %p104 = scmp.eq.s32.totalorder %s17, 0
      %p105 = por %p103, %p104
      %p106 = scmp.ne.s32.totalorder %s98, %s100
      %p107 = scmp.eq.s32.totalorder %s22, 3
      %p108 = por %p106, %p107
      %p109 = scmp.ne.s32.totalorder %s100, %s101
      %p110 = scmp.eq.s32.totalorder %s22, 0
      %p111 = por %p109, %p110
      %p112 = scmp.ne.s32.totalorder %s100, %s101
      %p113 = scmp.eq.s32.totalorder %s23, 3
      %p114 = por %p112, %p113
      %p116 = scmp.ne.s32.totalorder %s101, %s115
      %p117 = scmp.eq.s32.totalorder %s23, 0
      %p118 = por %p116, %p117
      %s120 = sadd.s32 %s119, 1
      %p123 = scmp.eq.s32.totalorder %s17, 3
      %p124 = scmp.ne.s32.totalorder %s119, %s121
      %p125 = scmp.eq.s32.totalorder %s17, 0
      %p126 = por %p124, %p125
      %p127 = scmp.ne.s32.totalorder %s119, %s121
      %p128 = scmp.eq.s32.totalorder %s22, 3
      %p129 = por %p127, %p128
      %p130 = scmp.ne.s32.totalorder %s121, %s122
      %p131 = scmp.eq.s32.totalorder %s22, 0
      %p132 = por %p130, %p131
      %p133 = scmp.ne.s32.totalorder %s121, %s122
      %p134 = scmp.eq.s32.totalorder %s23, 3
      %p135 = por %p133, %p134
      %p137 = scmp.ne.s32.totalorder %s122, %s136
      %p138 = scmp.eq.s32.totalorder %s23, 0
      %p139 = por %p137, %p138
      %s141 = sadd.s32 %s140, 1
      %p144 = scmp.eq.s32.totalorder %s17, 3
      %p145 = scmp.ne.s32.totalorder %s140, %s142
      %p146 = scmp.eq.s32.totalorder %s17, 0
      %p147 = por %p145, %p146
      %p148 = scmp.ne.s32.totalorder %s140, %s142
      %p149 = scmp.eq.s32.totalorder %s22, 3
      %p150 = por %p148, %p149
      %p151 = scmp.ne.s32.totalorder %s142, %s143
      %p152 = scmp.eq.s32.totalorder %s22, 0
      %p153 = por %p151, %p152
      %p154 = scmp.ne.s32.totalorder %s142, %s143
      %p155 = scmp.eq.s32.totalorder %s23, 3
      %p156 = por %p154, %p155
      %p158 = scmp.ne.s32.totalorder %s143, %s157
      %p159 = scmp.eq.s32.totalorder %s23, 0
      %p160 = por %p158, %p159
      %s162 = sadd.s32 %s161, 1
      %p165 = scmp.eq.s32.totalorder %s17, 3
      %p166 = scmp.ne.s32.totalorder %s161, %s163
      %p167 = scmp.eq.s32.totalorder %s17, 0
      %p168 = por %p166, %p167
      %p169 = scmp.ne.s32.totalorder %s161, %s163
      %p170 = scmp.eq.s32.totalorder %s22, 3
      %p171 = por %p169, %p170
      %p172 = scmp.ne.s32.totalorder %s163, %s164
      %p173 = scmp.eq.s32.totalorder %s22, 0
      %p174 = por %p172, %p173
      %p175 = scmp.ne.s32.totalorder %s163, %s164
      %p176 = scmp.eq.s32.totalorder %s23, 3
      %p177 = por %p175, %p176
      %p179 = scmp.ne.s32.totalorder %s164, %s178
      %p180 = scmp.eq.s32.totalorder %s23, 0
      %p181 = por %p179, %p180
      %s183 = sadd.s32 %s182, 1
      %p186 = scmp.eq.s32.totalorder %s17, 3
      %p187 = scmp.ne.s32.totalorder %s182, %s184
      %p188 = scmp.eq.s32.totalorder %s17, 0
      %p189 = por %p187, %p188
      %p190 = scmp.ne.s32.totalorder %s182, %s184
      %p191 = scmp.eq.s32.totalorder %s22, 3
      %p192 = por %p190, %p191
      %p193 = scmp.ne.s32.totalorder %s184, %s185
      %p194 = scmp.eq.s32.totalorder %s22, 0
      %p195 = por %p193, %p194
      %p196 = scmp.ne.s32.totalorder %s184, %s185
      %p197 = scmp.eq.s32.totalorder %s23, 3
      %p198 = por %p196, %p197
      %p200 = scmp.ne.s32.totalorder %s185, %s199
      %p201 = scmp.eq.s32.totalorder %s23, 0
      %p202 = por %p200, %p201
      %s203 = ssub.s32 %s17, %s24
      %p204 = scmp.eq.s32.totalorder %s203, 0
      %s206 = sadd.s32 %s205, 1
      %s207 = scalar_select %p204, %s205, %s206
      %p210 = pneg %p204
      %p211 = scmp.eq.s32.totalorder %s17, 3
      %p212 = por %p210, %p211
      %p213 = scmp.ne.s32.totalorder %s205, %s208
      %p214 = scmp.eq.s32.totalorder %s17, 0
      %p215 = por %p213, %p214
      %p216 = scmp.ne.s32.totalorder %s205, %s208
      %p217 = scmp.eq.s32.totalorder %s22, 3
      %p218 = por %p216, %p217
      %p219 = scmp.ne.s32.totalorder %s208, %s209
      %p220 = scmp.eq.s32.totalorder %s22, 0
      %p221 = por %p219, %p220
      %p222 = scmp.ne.s32.totalorder %s208, %s209
      %p223 = scmp.eq.s32.totalorder %s23, 3
      %p224 = por %p222, %p223
      %p226 = scmp.ne.s32.totalorder %s209, %s225
      %p227 = scmp.eq.s32.totalorder %s23, 0
      %p228 = por %p226, %p227
      %p229 = scmp.le.s32.totalorder 1, %s17
      %p230 = scmp.lt.s32.totalorder %s17, 5
      %p231 = pnand %p229, %p230
      %p232 = pneg %p231
      // Predicated region
      $region9: #{supervised_decoder_forward.1} parent=5 // pred_check
        _
      $region10: #{supervised_decoder_forward.1} parent=5 // pred_check_branch
        %234 = sbr.rel (%p231) target = $region12
      $region11: #{supervised_decoder_forward.1} parent=5 // pred_region
        %s235 = ssub.s32 %s17, 1
        // Predicated region
        $region13: #{supervised_decoder_forward.1} parent=11 // pred_check
          %p236 = pneg %p90
        $region14: #{supervised_decoder_forward.1} parent=11 // pred_check_branch
          %238 = sbr.rel (%p236) target = $region16
        $region15: #{supervised_decoder_forward.1} parent=11 // pred_region
          _
        $region16: #{supervised_decoder_forward.1} parent=11 // pred_fallthru
          _
        // Predicated region
        $region17: #{supervised_decoder_forward.1} parent=11 // pred_check
          %p239 = pneg %p111
        $region18: #{supervised_decoder_forward.1} parent=11 // pred_check_branch
          %241 = sbr.rel (%p239) target = $region20
        $region19: #{supervised_decoder_forward.1} parent=11 // pred_region
          _
        $region20: #{supervised_decoder_forward.1} parent=11 // pred_fallthru
          _
        // Predicated region
        $region21: #{supervised_decoder_forward.1} parent=11 // pred_check
          %p242 = pneg %p132
        $region22: #{supervised_decoder_forward.1} parent=11 // pred_check_branch
          %244 = sbr.rel (%p242) target = $region24
        $region23: #{supervised_decoder_forward.1} parent=11 // pred_region
          _
        $region24: #{supervised_decoder_forward.1} parent=11 // pred_fallthru
          _
        // Predicated region
        $region25: #{supervised_decoder_forward.1} parent=11 // pred_check
          %p245 = pneg %p153
        $region26: #{supervised_decoder_forward.1} parent=11 // pred_check_branch
          %247 = sbr.rel (%p245) target = $region28
        $region27: #{supervised_decoder_forward.1} parent=11 // pred_region
          _
        $region28: #{supervised_decoder_forward.1} parent=11 // pred_fallthru
          _
        // Predicated region
        $region29: #{supervised_decoder_forward.1} parent=11 // pred_check
          %p248 = pneg %p174
        $region30: #{supervised_decoder_forward.1} parent=11 // pred_check_branch
          %250 = sbr.rel (%p248) target = $region32
        $region31: #{supervised_decoder_forward.1} parent=11 // pred_region
          _
        $region32: #{supervised_decoder_forward.1} parent=11 // pred_fallthru
          _
        // Predicated region
        $region33: #{supervised_decoder_forward.1} parent=11 // pred_check
          %p251 = pneg %p195
        $region34: #{supervised_decoder_forward.1} parent=11 // pred_check_branch
          %253 = sbr.rel (%p251) target = $region36
        $region35: #{supervised_decoder_forward.1} parent=11 // pred_region
          _
        $region36: #{supervised_decoder_forward.1} parent=11 // pred_fallthru
          _
      $region12: #{supervised_decoder_forward.1} parent=5 // pred_fallthru
        _
      %p254 = scmp.lt.s32.totalorder %s17, 4
      // Predicated region
      $region37: #{supervised_decoder_forward.1} parent=5 // pred_check
        %p255 = pneg %p254
      $region38: #{supervised_decoder_forward.1} parent=5 // pred_check_branch
        %257 = sbr.rel (%p255) target = $region40
      $region39: #{supervised_decoder_forward.1} parent=5 // pred_region
        // Predicated region
        $region41: #{supervised_decoder_forward.1} parent=39 // pred_check
          %p258 = pneg %p37
        $region42: #{supervised_decoder_forward.1} parent=39 // pred_check_branch
          %260 = sbr.rel (%p258) target = $region44
        $region43: #{supervised_decoder_forward.1} parent=39 // pred_region
          %p261 = scmp.lt.s32.totalorder %s17, 3
          %s262 = scalar_select %p261, %s17, 3
          %s263 = smul.addr %s262, 8
          %s264 = scalar_lea.vmem %s0, %s263
        $region44: #{supervised_decoder_forward.1} parent=39 // pred_fallthru
          _
        // Predicated region
        $region45: #{supervised_decoder_forward.1} parent=39 // pred_check
          %p265 = pneg %p63
        $region46: #{supervised_decoder_forward.1} parent=39 // pred_check_branch
          %267 = sbr.rel (%p265) target = $region48
        $region47: #{supervised_decoder_forward.1} parent=39 // pred_region
          %p268 = scmp.lt.s32.totalorder %s17, 3
          %s269 = scalar_select %p268, %s17, 3
          %s270 = smul.addr %s269, 8
          %s271 = scalar_lea.vmem %s1, %s270
        $region48: #{supervised_decoder_forward.1} parent=39 // pred_fallthru
          _
      $region40: #{supervised_decoder_forward.1} parent=5 // pred_fallthru
        _
      %p272 = scmp.le.s32.totalorder 1, %s17
      %p273 = scmp.lt.s32.totalorder %s17, 5
      %p274 = pnand %p272, %p273
      %p275 = pneg %p274
      // Predicated region
      $region49: #{supervised_decoder_forward.1} parent=5 // pred_check
        _
      $region50: #{supervised_decoder_forward.1} parent=5 // pred_check_branch
        %277 = sbr.rel (%p274) target = $region52
      $region51: #{supervised_decoder_forward.1} parent=5 // pred_region
        %s278 = ssub.s32 %s17, 1
        %p279 = scmp.lt.s32.totalorder %s22, 3
        %s280 = scalar_select %p279, %s22, 3
        %s281 = smul.addr %s280, 8
        %s282 = scalar_lea.vmem %s0, %s281
        %p283 = pneg %p43
        %p284 = pneg %p40
        %p285 = scmp.lt.s32.totalorder %s22, 3
        %s286 = scalar_select %p285, %s22, 3
        %s287 = smul.addr %s286, 8
        %s288 = scalar_lea.vmem %s1, %s287
        %p289 = pneg %p69
        %p290 = pneg %p66
        %p291 = pneg %p90
        %p292 = pneg %p87
        %p293 = pneg %p111
        %p294 = pneg %p108
        %p295 = pneg %p132
        %p296 = pneg %p129
        %p297 = pneg %p153
        %p298 = pneg %p150
        %p299 = pneg %p174
        %p300 = pneg %p171
        %p301 = pneg %p195
        %p302 = pneg %p192
        %p303 = pneg %p221
        %p304 = pneg %p218
        %s305 = sand.u32 %s208, 1
        %s306 = scalar_lea.sflag [#allocation3], %s305
        %s307 = sand.u32 %s208, 1
        %s308 = smul.addr %s307, 8
        %s309 = scalar_lea.vmem [#allocation2], %s308
        %p310 = scmp.lt.s32.totalorder %s22, 3
        %s311 = scalar_select %p310, %s22, 3
        %s312 = smul.addr %s311, 8
        %s313 = scalar_lea.vmem %s0, %s312
        %p314 = scmp.lt.s32.totalorder %s22, 3
        %s315 = scalar_select %p314, %s22, 3
        %s316 = smul.addr %s315, 8
        %s317 = scalar_lea.vmem %s1, %s316
        %v318 = vld [vmem:[%s313] sm:$0xff]
        %v319 = vld [vmem:[%s317] sm:$0xff]
        %v320 = vld [vmem:[%s3] sm:$0xff]
        %v321 = vld [vmem:[%s3 + $0x8] sm:$0xff]
        %v322 = vld [vmem:[%s3 + $0x10] sm:$0xff]
        %v323 = vld [vmem:[%s3 + $0x18] sm:$0xff]
        %vm324 = vcmask 261120
        %v326 = vsel %vm324, %v318, 0
        %328 = vmatprep.subr.mxu0 0.0
        %329 = vmatpush1.msra.mxu0 %v320
        %330 = vmatprep.subr.mxu0 0.0
        %331 = vmatpush1.msra.mxu0 %v321
        %332 = vmatprep.subr.mxu0 0.0
        %333 = vmatpush1.msra.mxu0 %v322
        %334 = vmatprep.subr.mxu0 0.0
        %335 = vmatpush1.msra.mxu0 %v323
        %336 = vmatprep.subr.mxu0 0.0
        %337 = vmatpush1.msra.mxu0 0.0
        %338 = vmatprep.subr.mxu0 0.0
        %339 = vmatpush1.msra.mxu0 0.0
        %340 = vmatprep.subr.mxu0 0.0
        %341 = vmatpush1.msra.mxu0 0.0
        %342 = vmatprep.subr.mxu0 0.0
        %343 = vmatpush1.msra.mxu0 0.0
        %344 = vmatprep.subr.mxu0 0.0
        %345 = vmatpush1.msra.mxu0 0.0
        %346 = vmatprep.subr.mxu0 0.0
        %347 = vmatpush1.msra.mxu0 0.0
        %348 = vmatprep.subr.mxu0 0.0
        %349 = vmatpush1.msra.mxu0 0.0
        %350 = vmatprep.subr.mxu0 0.0
        %351 = vmatpush1.msra.mxu0 0.0
        %352 = vmatprep.subr.mxu0 0.0
        %353 = vmatpush1.msra.mxu0 0.0
        %354 = vmatprep.subr.mxu0 0.0
        %355 = vmatpush1.msra.mxu0 0.0
        %356 = vmatprep.subr.mxu0 0.0
        %357 = vmatpush1.msra.mxu0 0.0
        %358 = vmatprep.subr.mxu0 0.0
        %359 = vmatpush1.msra.mxu0 0.0
        %360 = vmatprep.subr.mxu0 0.0
        %361 = vmatpush1.msra.mxu0 0.0
        %362 = vmatprep.subr.mxu0 0.0
        %363 = vmatpush1.msra.mxu0 0.0
        %364 = vmatprep.subr.mxu0 0.0
        %365 = vmatpush1.msra.mxu0 0.0
        %366 = vmatprep.subr.mxu0 0.0
        %367 = vmatpush1.msra.mxu0 0.0
        %368 = vmatprep.subr.mxu0 0.0
        %369 = vmatpush1.msra.mxu0 0.0
        %370 = vmatprep.subr.mxu0 0.0
        %371 = vmatpush1.msra.mxu0 0.0
        %372 = vmatprep.subr.mxu0 0.0
        %373 = vmatpush1.msra.mxu0 0.0
        %374 = vmatprep.subr.mxu0 0.0
        %375 = vmatpush1.msra.mxu0 0.0
        %376 = vmatprep.subr.mxu0 0.0
        %377 = vmatpush1.msra.mxu0 0.0
        %378 = vmatprep.subr.mxu0 0.0
        %379 = vmatpush1.msra.mxu0 0.0
        %380 = vmatprep.subr.mxu0 0.0
        %381 = vmatpush1.msra.mxu0 0.0
        %382 = vmatprep.subr.mxu0 0.0
        %383 = vmatpush1.msra.mxu0 0.0
        %384 = vmatprep.subr.mxu0 0.0
        %385 = vmatpush1.msra.mxu0 0.0
        %386 = vmatprep.subr.mxu0 0.0
        %387 = vmatpush1.msra.mxu0 0.0
        %388 = vmatprep.subr.mxu0 0.0
        %389 = vmatpush1.msra.mxu0 0.0
        %390 = vmatprep.subr.mxu0 0.0
        %391 = vmatpush1.msra.mxu0 0.0
        %392 = vmatprep.mubr.f32.mxu0 0.0
        %393 = vmatmul.mubr.f32.gmra.mrb[0].mxu0 %v326
        %v394 = vpop.f32.mrb[0].mxu0
        %v395 = vadd.f32 0.0, %v394
        %v396 = vpop.f32.mrb[0].mxu0
        %397 = vdwg.mxu0
        %vm398 = vcmp.gt.f32.partialorder %v395, 0.0
        %v399 = vmul.f32 %v395, 0.01
        %v400 = vsel %vm398, %v395, %v399
        %v401 = vld [vmem:[%s7] sm:$0x1]
        %v402 = vld [vmem:[%s7 + $0x1] sm:$0x1]
        %vm403 = vcmask 130048
        %v404 = vsel %vm403, %v400, 0.0
        %v405 = vrot.slane %v404, 4
        %v406 = vadd.f32 %v404, %v405
        %v407 = vrot.slane %v406, 2
        %v408 = vadd.f32 %v406, %v407
        %v409 = vrot.slane %v408, 1
        %v410 = vadd.f32 %v408, %v409
        %v411 = vmul.f32 %v410, 0.125
        %v412 = vmul.f32 %v400, %v400
        %v413 = vsel %vm403, %v412, 0.0
        %v414 = vrot.slane %v413, 4
        %v415 = vadd.f32 %v413, %v414
        %v416 = vrot.slane %v415, 2
        %v417 = vadd.f32 %v415, %v416
        %v418 = vrot.slane %v417, 1
        %v419 = vadd.f32 %v417, %v418
        %v420 = vmul.f32 %v419, 0.125
        %v421 = vmul.f32 %v411, %v411
        %v422 = vsub.f32 %v420, %v421
        %v423 = vadd.f32 %v422, 1e-05
        %v424 = vrsqrt.pop %v423
        %v425 = vmul.f32 %v401, %v424
        %v426 = vmul.f32 %v411, %v425
        %v427 = vsub.f32 %v402, %v426
        %v428 = vlaneseq
        %v429 = vshrl.u32 %v428, 7
        %v430 = vsub.s32 0, %v429
        %v431 = vrot.slane %v425, %v430
        %v432 = vmul.f32 %v400, %v431
        %v433 = vlaneseq
        %v434 = vshrl.u32 %v433, 7
        %v435 = vsub.s32 0, %v434
        %v436 = vrot.slane %v427, %v435
        %v437 = vadd.f32 %v432, %v436
        %v438 = vlaneseq
        %v439 = vand.u32 %v438, 127
        %440 = vset.pattern.permute.xlu0 0
        %441 = vperm.xlu0 %440, %v319
        %v442 = vpop.permute.xlu0 %441
        %vm443 = vcmp.eq.s32.totalorder %v439, %v442
        %v444 = vsel %vm443, 1, 0
        %v445 = vcvt.s32.f32 %v444
        %v446 = vld [vmem:[%s2] sm:$0xff]
        %v447 = vld [vmem:[%s2 + $0x8] sm:$0xff]
        %v448 = vld [vmem:[%s2 + $0x10] sm:$0xff]
        %v449 = vld [vmem:[%s2 + $0x18] sm:$0xff]
        %v450 = vld [vmem:[%s2 + $0x20] sm:$0xff]
        %v451 = vld [vmem:[%s2 + $0x28] sm:$0xff]
        %v452 = vld [vmem:[%s2 + $0x30] sm:$0xff]
        %v453 = vld [vmem:[%s2 + $0x38] sm:$0xff]
        %v454 = vld [vmem:[%s2 + $0x40] sm:$0xff]
        %v455 = vld [vmem:[%s2 + $0x48] sm:$0xff]
        %v456 = vld [vmem:[%s2 + $0x50] sm:$0xff]
        %v457 = vld [vmem:[%s2 + $0x58] sm:$0xff]
        %v458 = vld [vmem:[%s2 + $0x60] sm:$0xff]
        %v459 = vld [vmem:[%s2 + $0x68] sm:$0xff]
        %v460 = vld [vmem:[%s2 + $0x70] sm:$0xff]
        %v461 = vld [vmem:[%s2 + $0x78] sm:$0xff]
        %462 = vmatprep.subr.mxu0 0.0
        %463 = vmatpush1.msra.mxu0 %v446
        %464 = vmatprep.subr.mxu0 0.0
        %465 = vmatpush1.msra.mxu0 %v447
        %466 = vmatprep.subr.mxu0 0.0
        %467 = vmatpush1.msra.mxu0 %v448
        %468 = vmatprep.subr.mxu0 0.0
        %469 = vmatpush1.msra.mxu0 %v449
        %470 = vmatprep.subr.mxu0 0.0
        %471 = vmatpush1.msra.mxu0 %v450
        %472 = vmatprep.subr.mxu0 0.0
        %473 = vmatpush1.msra.mxu0 %v451
        %474 = vmatprep.subr.mxu0 0.0
        %475 = vmatpush1.msra.mxu0 %v452
        %476 = vmatprep.subr.mxu0 0.0
        %477 = vmatpush1.msra.mxu0 %v453
        %478 = vmatprep.subr.mxu0 0.0
        %479 = vmatpush1.msra.mxu0 %v454
        %480 = vmatprep.subr.mxu0 0.0
        %481 = vmatpush1.msra.mxu0 %v455
        %482 = vmatprep.subr.mxu0 0.0
        %483 = vmatpush1.msra.mxu0 %v456
        %484 = vmatprep.subr.mxu0 0.0
        %485 = vmatpush1.msra.mxu0 %v457
        %486 = vmatprep.subr.mxu0 0.0
        %487 = vmatpush1.msra.mxu0 %v458
        %488 = vmatprep.subr.mxu0 0.0
        %489 = vmatpush1.msra.mxu0 %v459
        %490 = vmatprep.subr.mxu0 0.0
        %491 = vmatpush1.msra.mxu0 %v460
        %492 = vmatprep.subr.mxu0 0.0
        %493 = vmatpush1.msra.mxu0 %v461
        %494 = vmatprep.subr.mxu0 0.0
        %495 = vmatpush1.msra.mxu0 0.0
        %496 = vmatprep.subr.mxu0 0.0
        %497 = vmatpush1.msra.mxu0 0.0
        %498 = vmatprep.subr.mxu0 0.0
        %499 = vmatpush1.msra.mxu0 0.0
        %500 = vmatprep.subr.mxu0 0.0
        %501 = vmatpush1.msra.mxu0 0.0
        %502 = vmatprep.subr.mxu0 0.0
        %503 = vmatpush1.msra.mxu0 0.0
        %504 = vmatprep.subr.mxu0 0.0
        %505 = vmatpush1.msra.mxu0 0.0
        %506 = vmatprep.subr.mxu0 0.0
        %507 = vmatpush1.msra.mxu0 0.0
        %508 = vmatprep.subr.mxu0 0.0
        %509 = vmatpush1.msra.mxu0 0.0
        %510 = vmatprep.subr.mxu0 0.0
        %511 = vmatpush1.msra.mxu0 0.0
        %512 = vmatprep.subr.mxu0 0.0
        %513 = vmatpush1.msra.mxu0 0.0
        %514 = vmatprep.subr.mxu0 0.0
        %515 = vmatpush1.msra.mxu0 0.0
        %516 = vmatprep.subr.mxu0 0.0
        %517 = vmatpush1.msra.mxu0 0.0
        %518 = vmatprep.subr.mxu0 0.0
        %519 = vmatpush1.msra.mxu0 0.0
        %520 = vmatprep.subr.mxu0 0.0
        %521 = vmatpush1.msra.mxu0 0.0
        %522 = vmatprep.subr.mxu0 0.0
        %523 = vmatpush1.msra.mxu0 0.0
        %524 = vmatprep.subr.mxu0 0.0
        %525 = vmatpush1.msra.mxu0 0.0
        %526 = vmatprep.mubr.f32.mxu0 0.0
        %527 = vmatmul.mubr.f32.gmra.mrb[0].mxu0 %v445
        %v528 = vpop.f32.mrb[0].mxu0
        %v529 = vadd.f32 0.0, %v528
        %v530 = vpop.f32.mrb[0].mxu0
        %531 = vdwg.mxu0
        %533 = vrot.lane.b32.xlu0 %v529, 16
        %v534 = vpop.permute.xlu0 %533
        %v536 = vsel %vm403, %v437, %v534
        %v537 = vld [vmem:[%s4] sm:$0xff]
        %v538 = vld [vmem:[%s4 + $0x8] sm:$0xff]
        %v539 = vld [vmem:[%s4 + $0x10] sm:$0xff]
        %v540 = vld [vmem:[%s4 + $0x18] sm:$0xff]
        %v541 = vld [vmem:[%s4 + $0x20] sm:$0xff]
        %v542 = vld [vmem:[%s4 + $0x28] sm:$0xff]
        %vm543 = vcmask 392192
        %v545 = vsel %vm543, %v536, 0
        %547 = vmatprep.subr.mxu0 0.0
        %548 = vmatpush1.msra.mxu0 %v537
        %549 = vmatprep.subr.mxu0 0.0
        %550 = vmatpush1.msra.mxu0 %v538
        %551 = vmatprep.subr.mxu0 0.0
        %552 = vmatpush1.msra.mxu0 %v539
        %553 = vmatprep.subr.mxu0 0.0
        %554 = vmatpush1.msra.mxu0 %v540
        %555 = vmatprep.subr.mxu0 0.0
        %556 = vmatpush1.msra.mxu0 %v541
        %557 = vmatprep.subr.mxu0 0.0
        %558 = vmatpush1.msra.mxu0 %v542
        %559 = vmatprep.subr.mxu0 0.0
        %560 = vmatpush1.msra.mxu0 0.0
        %561 = vmatprep.subr.mxu0 0.0
        %562 = vmatpush1.msra.mxu0 0.0
        %563 = vmatprep.subr.mxu0 0.0
        %564 = vmatpush1.msra.mxu0 0.0
        %565 = vmatprep.subr.mxu0 0.0
        %566 = vmatpush1.msra.mxu0 0.0
        %567 = vmatprep.subr.mxu0 0.0
        %568 = vmatpush1.msra.mxu0 0.0
        %569 = vmatprep.subr.mxu0 0.0
        %570 = vmatpush1.msra.mxu0 0.0
        %571 = vmatprep.subr.mxu0 0.0
        %572 = vmatpush1.msra.mxu0 0.0
        %573 = vmatprep.subr.mxu0 0.0
        %574 = vmatpush1.msra.mxu0 0.0
        %575 = vmatprep.subr.mxu0 0.0
        %576 = vmatpush1.msra.mxu0 0.0
        %577 = vmatprep.subr.mxu0 0.0
        %578 = vmatpush1.msra.mxu0 0.0
        %579 = vmatprep.subr.mxu0 0.0
        %580 = vmatpush1.msra.mxu0 0.0
        %581 = vmatprep.subr.mxu0 0.0
        %582 = vmatpush1.msra.mxu0 0.0
        %583 = vmatprep.subr.mxu0 0.0
        %584 = vmatpush1.msra.mxu0 0.0
        %585 = vmatprep.subr.mxu0 0.0
        %586 = vmatpush1.msra.mxu0 0.0
        %587 = vmatprep.subr.mxu0 0.0
        %588 = vmatpush1.msra.mxu0 0.0
        %589 = vmatprep.subr.mxu0 0.0
        %590 = vmatpush1.msra.mxu0 0.0
        %591 = vmatprep.subr.mxu0 0.0
        %592 = vmatpush1.msra.mxu0 0.0
        %593 = vmatprep.subr.mxu0 0.0
        %594 = vmatpush1.msra.mxu0 0.0
        %595 = vmatprep.subr.mxu0 0.0
        %596 = vmatpush1.msra.mxu0 0.0
        %597 = vmatprep.subr.mxu0 0.0
        %598 = vmatpush1.msra.mxu0 0.0
        %599 = vmatprep.subr.mxu0 0.0
        %600 = vmatpush1.msra.mxu0 0.0
        %601 = vmatprep.subr.mxu0 0.0
        %602 = vmatpush1.msra.mxu0 0.0
        %603 = vmatprep.subr.mxu0 0.0
        %604 = vmatpush1.msra.mxu0 0.0
        %605 = vmatprep.subr.mxu0 0.0
        %606 = vmatpush1.msra.mxu0 0.0
        %607 = vmatprep.subr.mxu0 0.0
        %608 = vmatpush1.msra.mxu0 0.0
        %609 = vmatprep.subr.mxu0 0.0
        %610 = vmatpush1.msra.mxu0 0.0
        %611 = vmatprep.mubr.f32.mxu0 0.0
        %612 = vmatmul.mubr.f32.gmra.mrb[0].mxu0 %v545
        %v613 = vpop.f32.mrb[0].mxu0
        %v614 = vadd.f32 0.0, %v613
        %v615 = vpop.f32.mrb[0].mxu0
        %616 = vdwg.mxu0
        %vm617 = vcmp.gt.f32.partialorder %v614, 0.0
        %v618 = vmul.f32 %v614, 0.01
        %v619 = vsel %vm617, %v614, %v618
        %v620 = vld [vmem:[%s7 + $0x2] sm:$0x1]
        %v621 = vld [vmem:[%s7 + $0x3] sm:$0x1]
        %v622 = vsel %vm324, %v619, 0.0
        %v623 = vrot.slane %v622, 4
        %v624 = vadd.f32 %v622, %v623
        %v625 = vrot.slane %v624, 2
        %v626 = vadd.f32 %v624, %v625
        %v627 = vrot.slane %v626, 1
        %v628 = vadd.f32 %v626, %v627
        %v629 = vmul.f32 %v628, 0.125
        %v630 = vmul.f32 %v619, %v619
        %v631 = vsel %vm324, %v630, 0.0
        %v632 = vrot.slane %v631, 4
        %v633 = vadd.f32 %v631, %v632
        %v634 = vrot.slane %v633, 2
        %v635 = vadd.f32 %v633, %v634
        %v636 = vrot.slane %v635, 1
        %v637 = vadd.f32 %v635, %v636
        %v638 = vmul.f32 %v637, 0.125
        %v639 = vmul.f32 %v629, %v629
        %v640 = vsub.f32 %v638, %v639
        %v641 = vadd.f32 %v640, 1e-05
        %v642 = vrsqrt.pop %v641
        %v643 = vmul.f32 %v620, %v642
        %v644 = vmul.f32 %v629, %v643
        %v645 = vsub.f32 %v621, %v644
        %v646 = vlaneseq
        %v647 = vshrl.u32 %v646, 7
        %v648 = vsub.s32 0, %v647
        %v649 = vrot.slane %v643, %v648
        %v650 = vmul.f32 %v619, %v649
        %v651 = vlaneseq
        %v652 = vshrl.u32 %v651, 7
        %v653 = vsub.s32 0, %v652
        %v654 = vrot.slane %v645, %v653
        %v655 = vadd.f32 %v650, %v654
        %656 = vrot.lane.b32.xlu0 %v529, 32
        %v657 = vpop.permute.xlu0 %656
        %v659 = vsel %vm324, %v655, %v657
        %v660 = vld [vmem:[%s5] sm:$0xff]
        %v661 = vld [vmem:[%s5 + $0x8] sm:$0xff]
        %v662 = vld [vmem:[%s5 + $0x10] sm:$0xff]
        %v663 = vld [vmem:[%s5 + $0x18] sm:$0xff]
        %v664 = vld [vmem:[%s5 + $0x20] sm:$0xff]
        %v665 = vld [vmem:[%s5 + $0x28] sm:$0xff]
        %v666 = vld [vmem:[%s5 + $0x30] sm:$0xff]
        %v667 = vld [vmem:[%s5 + $0x38] sm:$0xff]
        %vm668 = vcmask 523264
        %v670 = vsel %vm668, %v659, 0
        %672 = vmatprep.subr.mxu0 0.0
        %673 = vmatpush1.msra.mxu0 %v660
        %674 = vmatprep.subr.mxu0 0.0
        %675 = vmatpush1.msra.mxu0 %v661
        %676 = vmatprep.subr.mxu0 0.0
        %677 = vmatpush1.msra.mxu0 %v662
        %678 = vmatprep.subr.mxu0 0.0
        %679 = vmatpush1.msra.mxu0 %v663
        %680 = vmatprep.subr.mxu0 0.0
        %681 = vmatpush1.msra.mxu0 %v664
        %682 = vmatprep.subr.mxu0 0.0
        %683 = vmatpush1.msra.mxu0 %v665
        %684 = vmatprep.subr.mxu0 0.0
        %685 = vmatpush1.msra.mxu0 %v666
        %686 = vmatprep.subr.mxu0 0.0
        %687 = vmatpush1.msra.mxu0 %v667
        %688 = vmatprep.subr.mxu0 0.0
        %689 = vmatpush1.msra.mxu0 0.0
        %690 = vmatprep.subr.mxu0 0.0
        %691 = vmatpush1.msra.mxu0 0.0
        %692 = vmatprep.subr.mxu0 0.0
        %693 = vmatpush1.msra.mxu0 0.0
        %694 = vmatprep.subr.mxu0 0.0
        %695 = vmatpush1.msra.mxu0 0.0
        %696 = vmatprep.subr.mxu0 0.0
        %697 = vmatpush1.msra.mxu0 0.0
        %698 = vmatprep.subr.mxu0 0.0
        %699 = vmatpush1.msra.mxu0 0.0
        %700 = vmatprep.subr.mxu0 0.0
        %701 = vmatpush1.msra.mxu0 0.0
        %702 = vmatprep.subr.mxu0 0.0
        %703 = vmatpush1.msra.mxu0 0.0
        %704 = vmatprep.subr.mxu0 0.0
        %705 = vmatpush1.msra.mxu0 0.0
        %706 = vmatprep.subr.mxu0 0.0
        %707 = vmatpush1.msra.mxu0 0.0
        %708 = vmatprep.subr.mxu0 0.0
        %709 = vmatpush1.msra.mxu0 0.0
        %710 = vmatprep.subr.mxu0 0.0
        %711 = vmatpush1.msra.mxu0 0.0
        %712 = vmatprep.subr.mxu0 0.0
        %713 = vmatpush1.msra.mxu0 0.0
        %714 = vmatprep.subr.mxu0 0.0
        %715 = vmatpush1.msra.mxu0 0.0
        %716 = vmatprep.subr.mxu0 0.0
        %717 = vmatpush1.msra.mxu0 0.0
        %718 = vmatprep.subr.mxu0 0.0
        %719 = vmatpush1.msra.mxu0 0.0
        %720 = vmatprep.subr.mxu0 0.0
        %721 = vmatpush1.msra.mxu0 0.0
        %722 = vmatprep.subr.mxu0 0.0
        %723 = vmatpush1.msra.mxu0 0.0
        %724 = vmatprep.subr.mxu0 0.0
        %725 = vmatpush1.msra.mxu0 0.0
        %726 = vmatprep.subr.mxu0 0.0
        %727 = vmatpush1.msra.mxu0 0.0
        %728 = vmatprep.subr.mxu0 0.0
        %729 = vmatpush1.msra.mxu0 0.0
        %730 = vmatprep.subr.mxu0 0.0
        %731 = vmatpush1.msra.mxu0 0.0
        %732 = vmatprep.subr.mxu0 0.0
        %733 = vmatpush1.msra.mxu0 0.0
        %734 = vmatprep.subr.mxu0 0.0
        %735 = vmatpush1.msra.mxu0 0.0
        %736 = vmatprep.mubr.f32.mxu0 0.0
        %737 = vmatmul.mubr.f32.gmra.mrb[0].mxu0 %v670
        %v738 = vpop.f32.mrb[0].mxu0
        %v739 = vadd.f32 0.0, %v738
        %v740 = vpop.f32.mrb[0].mxu0
        %741 = vdwg.mxu0
        %vm742 = vcmp.gt.f32.partialorder %v739, 0.0
        %v743 = vmul.f32 %v739, 0.01
        %v744 = vsel %vm742, %v739, %v743
        %v745 = vld [vmem:[%s7 + $0x4] sm:$0x1]
        %v746 = vld [vmem:[%s7 + $0x5] sm:$0x1]
        %v747 = vsel %vm668, %v744, 0.0
        %v748 = vrot.slane %v747, 4
        %v749 = vadd.f32 %v747, %v748
        %v750 = vrot.slane %v749, 2
        %v751 = vadd.f32 %v749, %v750
        %v752 = vrot.slane %v751, 1
        %v753 = vadd.f32 %v751, %v752
        %v754 = vmul.f32 %v753, 0.125
        %v755 = vmul.f32 %v744, %v744
        %v756 = vsel %vm668, %v755, 0.0
        %v757 = vrot.slane %v756, 4
        %v758 = vadd.f32 %v756, %v757
        %v759 = vrot.slane %v758, 2
        %v760 = vadd.f32 %v758, %v759
        %v761 = vrot.slane %v760, 1
        %v762 = vadd.f32 %v760, %v761
        %v763 = vmul.f32 %v762, 0.125
        %v764 = vmul.f32 %v754, %v754
        %v765 = vsub.f32 %v763, %v764
        %v766 = vadd.f32 %v765, 1e-05
        %v767 = vrsqrt.pop %v766
        %v768 = vmul.f32 %v745, %v767
        %v769 = vmul.f32 %v754, %v768
        %v770 = vsub.f32 %v746, %v769
        %v771 = vlaneseq
        %v772 = vshrl.u32 %v771, 7
        %v773 = vsub.s32 0, %v772
        %v774 = vrot.slane %v768, %v773
        %v775 = vmul.f32 %v744, %v774
        %v776 = vlaneseq
        %v777 = vshrl.u32 %v776, 7
        %v778 = vsub.s32 0, %v777
        %v779 = vrot.slane %v770, %v778
        %v780 = vadd.f32 %v775, %v779
        %781 = vrot.lane.b32.xlu0 %v529, 64
        %v782 = vpop.permute.xlu0 %781
        %v784 = vsel %vm668, %v780, %v782
        %v785 = vld [vmem:[%s6] sm:$0xff]
        %v786 = vld [vmem:[%s6 + $0x8] sm:$0xff]
        %v787 = vld [vmem:[%s6 + $0x10] sm:$0xff]
        %v788 = vld [vmem:[%s6 + $0x18] sm:$0xff]
        %v789 = vld [vmem:[%s6 + $0x20] sm:$0xff]
        %v790 = vld [vmem:[%s6 + $0x28] sm:$0xff]
        %v791 = vld [vmem:[%s6 + $0x30] sm:$0xff]
        %v792 = vld [vmem:[%s6 + $0x38] sm:$0xff]
        %v793 = vld [vmem:[%s6 + $0x40] sm:$0xff]
        %v794 = vld [vmem:[%s6 + $0x48] sm:$0xff]
        %v795 = vld [vmem:[%s6 + $0x50] sm:$0xff]
        %v796 = vld [vmem:[%s6 + $0x58] sm:$0xff]
        %vm797 = vcmask 785408
        %v799 = vsel %vm797, %v784, 0
        %801 = vmatprep.subr.mxu0 0.0
        %802 = vmatpush1.msra.mxu0 %v785
        %803 = vmatprep.subr.mxu0 0.0
        %804 = vmatpush1.msra.mxu0 %v786
        %805 = vmatprep.subr.mxu0 0.0
        %806 = vmatpush1.msra.mxu0 %v787
        %807 = vmatprep.subr.mxu0 0.0
        %808 = vmatpush1.msra.mxu0 %v788
        %809 = vmatprep.subr.mxu0 0.0
        %810 = vmatpush1.msra.mxu0 %v789
        %811 = vmatprep.subr.mxu0 0.0
        %812 = vmatpush1.msra.mxu0 %v790
        %813 = vmatprep.subr.mxu0 0.0
        %814 = vmatpush1.msra.mxu0 %v791
        %815 = vmatprep.subr.mxu0 0.0
        %816 = vmatpush1.msra.mxu0 %v792
        %817 = vmatprep.subr.mxu0 0.0
        %818 = vmatpush1.msra.mxu0 %v793
        %819 = vmatprep.subr.mxu0 0.0
        %820 = vmatpush1.msra.mxu0 %v794
        %821 = vmatprep.subr.mxu0 0.0
        %822 = vmatpush1.msra.mxu0 %v795
        %823 = vmatprep.subr.mxu0 0.0
        %824 = vmatpush1.msra.mxu0 %v796
        %825 = vmatprep.subr.mxu0 0.0
        %826 = vmatpush1.msra.mxu0 0.0
        %827 = vmatprep.subr.mxu0 0.0
        %828 = vmatpush1.msra.mxu0 0.0
        %829 = vmatprep.subr.mxu0 0.0
        %830 = vmatpush1.msra.mxu0 0.0
        %831 = vmatprep.subr.mxu0 0.0
        %832 = vmatpush1.msra.mxu0 0.0
        %833 = vmatprep.subr.mxu0 0.0
        %834 = vmatpush1.msra.mxu0 0.0
        %835 = vmatprep.subr.mxu0 0.0
        %836 = vmatpush1.msra.mxu0 0.0
        %837 = vmatprep.subr.mxu0 0.0
        %838 = vmatpush1.msra.mxu0 0.0
        %839 = vmatprep.subr.mxu0 0.0
        %840 = vmatpush1.msra.mxu0 0.0
        %841 = vmatprep.subr.mxu0 0.0
        %842 = vmatpush1.msra.mxu0 0.0
        %843 = vmatprep.subr.mxu0 0.0
        %844 = vmatpush1.msra.mxu0 0.0
        %845 = vmatprep.subr.mxu0 0.0
        %846 = vmatpush1.msra.mxu0 0.0
        %847 = vmatprep.subr.mxu0 0.0
        %848 = vmatpush1.msra.mxu0 0.0
        %849 = vmatprep.subr.mxu0 0.0
        %850 = vmatpush1.msra.mxu0 0.0
        %851 = vmatprep.subr.mxu0 0.0
        %852 = vmatpush1.msra.mxu0 0.0
        %853 = vmatprep.subr.mxu0 0.0
        %854 = vmatpush1.msra.mxu0 0.0
        %855 = vmatprep.subr.mxu0 0.0
        %856 = vmatpush1.msra.mxu0 0.0
        %857 = vmatprep.subr.mxu0 0.0
        %858 = vmatpush1.msra.mxu0 0.0
        %859 = vmatprep.subr.mxu0 0.0
        %860 = vmatpush1.msra.mxu0 0.0
        %861 = vmatprep.subr.mxu0 0.0
        %862 = vmatpush1.msra.mxu0 0.0
        %863 = vmatprep.subr.mxu0 0.0
        %864 = vmatpush1.msra.mxu0 0.0
        %865 = vmatprep.mubr.f32.mxu0 0.0
        %866 = vmatmul.mubr.f32.gmra.mrb[0].mxu0 %v799
        %v867 = vpop.f32.mrb[0].mxu0
        %v868 = vadd.f32 0.0, %v867
        %v869 = vpop.f32.mrb[0].mxu0
        %870 = vdwg.mxu0
        %871 = vst [vmem:[%s309] sm:$0xff] %v868
        %s872 = sand.u32 %s208, 1
        %s873 = scalar_lea.sflag [#allocation3], %s872
        %s874 = sand.u32 %s208, 1
        %s875 = smul.addr %s874, 8
        %s876 = scalar_lea.vmem [#allocation2], %s875
        // Predicated region
        $region53: #{supervised_decoder_forward.1} parent=51 // pred_check
          %p877 = pneg %p218
        $region54: #{supervised_decoder_forward.1} parent=51 // pred_check_branch
          %879 = sbr.rel (%p877) target = $region56
        $region55: #{supervised_decoder_forward.1} parent=51 // pred_region
          %s881 = ssub.s32 128, 128
          %882 = vsyncadd %s873, %s881
          %s883 = smul.addr %s22, 128
          %s884 = scalar_lea.hbm %s8, %s883
          %s886 = sshll.u32 %s876, 4
          %s887 = int_to_ptr.vmem [resolvable:$true] %s886
          %889 = dma.vmem_to_hbm [thread:$0]  %s887, 128, %s884, %s873
        $region56: #{supervised_decoder_forward.1} parent=51 // pred_fallthru
          _
      $region52: #{supervised_decoder_forward.1} parent=5 // pred_fallthru
        _
      %p890 = scmp.le.s32.totalorder 2, %s17
      // Predicated region
      $region57: #{supervised_decoder_forward.1} parent=5 // pred_check
        %p891 = pneg %p890
      $region58: #{supervised_decoder_forward.1} parent=5 // pred_check_branch
        %893 = sbr.rel (%p891) target = $region60
      $region59: #{supervised_decoder_forward.1} parent=5 // pred_region
        %s894 = ssub.s32 %s17, 2
        // Predicated region
        $region61: #{supervised_decoder_forward.1} parent=59 // pred_check
          %p895 = pneg %p224
        $region62: #{supervised_decoder_forward.1} parent=59 // pred_check_branch
          %897 = sbr.rel (%p895) target = $region64
        $region63: #{supervised_decoder_forward.1} parent=59 // pred_region
          %s898 = sand.u32 %s209, 1
          %s899 = scalar_lea.sflag [#allocation3], %s898
          %s900 = sand.u32 %s209, 1
          %s901 = smul.addr %s900, 8
          %s902 = scalar_lea.vmem [#allocation2], %s901
          %903 = dma.done %s899, 128
        $region64: #{supervised_decoder_forward.1} parent=59 // pred_fallthru
          _
      $region60: #{supervised_decoder_forward.1} parent=5 // pred_fallthru
        _
    $region6: #{supervised_decoder_forward.1} parent=1 // loop_footer
      %s21 = sadd.s32 1, %s17
    $region7: #{supervised_decoder_forward.1} parent=1 // loop_footer_branch
      %16 = sbr.rel target = $region3
    $region8: #{supervised_decoder_forward.1} parent=1 // loop_exit
      _
    %904 = vsyncpa [#allocation3], 1
    %s905 = scalar_lea.sflag [#allocation3], 1
    %906 = vsyncpa %s905, 1

</llo_original>
